<compile_context>
chip_gen: v6e
topology: v6e:2x2x1
jax: 0.10.0
libtpu: 0.0.40
codegen_flags: <defaults>
</compile_context>

<pallas_src>
import functools

import jax
import jax.numpy as jnp
from jax.experimental import pallas as pl
from jax.experimental.pallas import tpu as pltpu


def _round_up(x: int, m: int) -> int:
    return (x + m - 1) // m * m


def _pick_rows(m: int, cap: int):
    """Pick a row-tile size, preferring one that divides M (no pad copy)."""
    if m <= cap:
        return m, m                              # single tile == full dim
    if m % 8 == 0:
        t = (cap // 8) * 8
        while t >= 128:
            if m % t == 0:
                return t, m                      # exact divisor, no pad
            t -= 8
    # TODO(synk): handle the ragged tail with a second small pallas_call
    # instead of a full-tensor pad copy (only reached for awkward M).
    t = max(8, (cap // 8) * 8)
    return t, _round_up(m, t)


def adapter_kernel(x_ref, wd_ref, bd_ref, g_ref, beta_ref, wu_ref, bu_ref,
                   o_ref, *, a_true: int, a_pad: int):
    x = x_ref[...]                                        # (TM, Hp), io dtype

    # down_project on the MXU: bf16 x bf16 operands, f32 accumulation.
    down = jnp.dot(x.astype(jnp.bfloat16), wd_ref[...],
                   preferred_element_type=jnp.float32)
    down = down + bd_ref[...]                             # f32 bias

    # LayerNorm over the true adapter width (eps=1e-12), two-pass variance.
    # Padded lanes are masked so the statistics are exact.
    inv_a = jnp.float32(1.0 / a_true)
    mean = jnp.sum(down, axis=-1, keepdims=True) * inv_a
    centered = down - mean
    if a_pad != a_true:
        lane = jax.lax.broadcasted_iota(jnp.int32, (1, a_pad), 1)
        centered = jnp.where(lane < a_true, centered, 0.0)
    var = jnp.sum(centered * centered, axis=-1, keepdims=True) * inv_a
    normed = centered * jax.lax.rsqrt(var + jnp.float32(1e-12))
    normed = normed * g_ref[...] + beta_ref[...]

    # dropout(p=0.5): identity in eval mode.
    # TODO(synk): training-mode dropout via pltpu.prng_seed/prng_random_bits.
    activated = normed

    # up_project (MXU, bf16 operands) + residual in f32; cast only on store.
    up = jnp.dot(activated.astype(jnp.bfloat16), wu_ref[...],
                 preferred_element_type=jnp.float32)
    up = up + bu_ref[...]
    o_ref[...] = (x.astype(jnp.float32) + up).astype(o_ref.dtype)


def bert_adapter(x, w_down, b_down, gamma, beta, w_up, b_up, *,
                 tm: int = 1024, use_core_parallel: bool = False):
    """x: (B, S, H). Weights stored as (in, out). Returns (B, S, H).

    Pass bf16 hidden states to halve HBM traffic — the kernel is BW-bound.
    """
    B, S, H = x.shape
    A = w_down.shape[1]
    M = B * S
    io_dtype = x.dtype
    io_bytes = jnp.dtype(io_dtype).itemsize

    x2 = x.reshape(M, H)
    fresh = False          # has the wrapper already materialized a copy of x?

    # Lane-dense hidden dim: pad H to a multiple of 128 only if needed so the
    # output stores are full vst's (BERT H=768/1024 needs no pad).
    h_pad = _round_up(H, 128)
    if h_pad != H:
        x2 = jnp.pad(x2, ((0, 0), (0, h_pad - H)))
        w_down = jnp.pad(w_down, ((0, h_pad - H), (0, 0)))
        w_up = jnp.pad(w_up, ((0, 0), (0, h_pad - H)))
        b_up = jnp.pad(b_up, ((0, 0), (0, h_pad - H)))
        fresh = True

    # Lane-pad the adapter dim to a multiple of 128 (zero pads; LN masks them).
    # Do NOT pad to 256 for the wide MXU — the kernel is HBM-bound.
    a_pad = _round_up(A, 128)
    if a_pad != A:
        pad = a_pad - A
        w_down = jnp.pad(w_down, ((0, 0), (0, pad)))
        b_down = jnp.pad(b_down, ((0, 0), (0, pad)))
        gamma = jnp.pad(gamma, ((0, 0), (0, pad)))
        beta = jnp.pad(beta, ((0, 0), (0, pad)))
        w_up = jnp.pad(w_up, ((0, pad), (0, 0)))

    # bf16 MXU operand path; accumulation / LN / residual stay f32.
    w_down = w_down.astype(jnp.bfloat16)
    w_up = w_up.astype(jnp.bfloat16)
    b_down = b_down.astype(jnp.float32)
    gamma = gamma.astype(jnp.float32)
    beta = beta.astype(jnp.float32)
    b_up = b_up.astype(jnp.float32)

    # ---- VMEM-budgeted row tile (v7x: 64 MiB/TC, v5e/v6e: 128 MiB) ---------
    vmem_cap = 64 << 20                      # assume smallest (v7x) if unknown
    try:
        vmem_cap = int(pltpu.get_tpu_info().vmem_capacity_bytes)
    except Exception:
        pass
    vmem_limit = int(min(vmem_cap * 3 // 4, 100 << 20))
    budget = int(vmem_limit * 0.7)

    weight_bytes = 2 * (2 * h_pad * a_pad * 2 + (3 * a_pad + h_pad) * 4)
    per_row = 2 * 2 * h_pad * io_bytes + 4 * a_pad * 4   # x+out dbl-buf + temps
    tm_cap = max(8, min(tm, max(1, (budget - weight_bytes) // per_row)))
    tm_cap = max(8, (tm_cap // 8) * 8)

    tm_eff, m_pad = _pick_rows(M, tm_cap)
    if m_pad != M:
        x2 = jnp.pad(x2, ((0, m_pad - M), (0, 0)))
        fresh = True

    grid = (m_pad // tm_eff,)

    # Alias x -> out only when the wrapper already owns a fresh copy of x;
    # otherwise XLA inserts a defensive full-tensor copy that costs more.
    io_alias = {0: 0} if fresh else {}

    dim_sem = (pltpu.CORE_PARALLEL,) if use_core_parallel else ("parallel",)

    out = pl.pallas_call(
        functools.partial(adapter_kernel, a_true=A, a_pad=a_pad),
        out_shape=jax.ShapeDtypeStruct((m_pad, h_pad), io_dtype),
        grid=grid,
        in_specs=[
            pl.BlockSpec((tm_eff, h_pad), lambda i: (i, 0)),   # x (pipelined)
            pl.BlockSpec((h_pad, a_pad), lambda i: (0, 0)),    # W_down (resident)
            pl.BlockSpec((1, a_pad), lambda i: (0, 0)),        # b_down
            pl.BlockSpec((1, a_pad), lambda i: (0, 0)),        # LN gamma
            pl.BlockSpec((1, a_pad), lambda i: (0, 0)),        # LN beta
            pl.BlockSpec((a_pad, h_pad), lambda i: (0, 0)),    # W_up (resident)
            pl.BlockSpec((1, h_pad), lambda i: (0, 0)),        # b_up
        ],
        out_specs=pl.BlockSpec((tm_eff, h_pad), lambda i: (i, 0)),
        input_output_aliases=io_alias,
        compiler_params=pltpu.CompilerParams(
            dimension_semantics=dim_sem,
            vmem_limit_bytes=vmem_limit),
        cost_estimate=pl.CostEstimate(
            flops=4 * m_pad * h_pad * a_pad,
            transcendentals=m_pad,
            bytes_accessed=int(2 * m_pad * h_pad * io_bytes
                               + 2 * h_pad * a_pad * 2
                               + (3 * a_pad + h_pad) * 4)),
    )(x2, w_down, b_down, gamma, beta, w_up, b_up)

    if m_pad != M or h_pad != H:
        out = out[:M, :H]
    return out.reshape(B, S, H)


def reference(x, w_down, b_down, gamma, beta, w_up, b_up):
    down = x @ w_down + b_down[0]
    mean = down.mean(-1, keepdims=True)
    var = ((down - mean) ** 2).mean(-1, keepdims=True)
    normed = (down - mean) / jnp.sqrt(var + 1e-12) * gamma[0] + beta[0]
    up = normed @ w_up + b_up[0]
    return x + up


if __name__ == "__main__":
    # Small config: batch=2, seq=8, hidden=32, adapter=16
    B, S, H, A = 2, 8, 32, 16
    adapter_initializer_range = 0.02

    key = jax.random.PRNGKey(0)
    kx, kwd, kwu = jax.random.split(key, 3)

    x = jax.random.normal(kx, (B, S, H), dtype=jnp.float32)

    # nn.init.normal_(weight, std=adapter_initializer_range), zero biases.
    # Stored as (in, out) = transpose of PyTorch's (out, in); distribution is
    # identical under this deterministic synthetic init.
    w_down = jax.random.normal(kwd, (H, A), jnp.float32) * adapter_initializer_range
    b_down = jnp.zeros((1, A), jnp.float32)
    gamma = jnp.ones((1, A), jnp.float32)      # LayerNorm weight init = 1
    beta = jnp.zeros((1, A), jnp.float32)      # LayerNorm bias init = 0
    w_up = jax.random.normal(kwu, (A, H), jnp.float32) * adapter_initializer_range
    b_up = jnp.zeros((1, H), jnp.float32)

    out = bert_adapter(x, w_down, b_down, gamma, beta, w_up, b_up)
    out = jax.block_until_ready(out)

    ref = reference(x, w_down, b_down, gamma, beta, w_up, b_up)
    assert out.shape == (B, S, H)
    # bf16 MXU operands -> tolerance loosened vs the pure-f32 reference.
    assert jnp.allclose(out, ref, atol=1e-2, rtol=1e-2), "mismatch vs reference"

    print("KERNEL_OK")
</pallas_src>

<mosaic_0001>
module attributes {stable_mosaic.version = 11 : i64} {
  func.func @adapter_kernel(%arg0: i32, %arg1: memref<16x128xf32, #tpu.memory_space<vmem>>, %arg2: memref<128x128xbf16, #tpu.memory_space<vmem>>, %arg3: memref<1x128xf32, #tpu.memory_space<vmem>>, %arg4: memref<1x128xf32, #tpu.memory_space<vmem>>, %arg5: memref<1x128xf32, #tpu.memory_space<vmem>>, %arg6: memref<128x128xbf16, #tpu.memory_space<vmem>>, %arg7: memref<1x128xf32, #tpu.memory_space<vmem>>, %arg8: memref<16x128xf32, #tpu.memory_space<vmem>>) attributes {dimension_semantics = [#tpu.dimension_semantics<parallel>], iteration_bounds = array<i64: 1>, scalar_prefetch = 0 : i64, scratch_operands = 0 : i64, tpu.core_type = #tpu.core_type<tc>, window_params = [{transform_indices = @transform_0, window_bounds = array<i64: 16, 128>}, {pipeline_mode = #tpu.pipeline_mode<synchronous>, transform_indices = @transform_1, window_bounds = array<i64: 128, 128>}, {pipeline_mode = #tpu.pipeline_mode<synchronous>, transform_indices = @transform_2, window_bounds = array<i64: 1, 128>}, {pipeline_mode = #tpu.pipeline_mode<synchronous>, transform_indices = @transform_3, window_bounds = array<i64: 1, 128>}, {pipeline_mode = #tpu.pipeline_mode<synchronous>, transform_indices = @transform_4, window_bounds = array<i64: 1, 128>}, {pipeline_mode = #tpu.pipeline_mode<synchronous>, transform_indices = @transform_5, window_bounds = array<i64: 128, 128>}, {pipeline_mode = #tpu.pipeline_mode<synchronous>, transform_indices = @transform_6, window_bounds = array<i64: 1, 128>}, {transform_indices = @transform_7, window_bounds = array<i64: 16, 128>}]} {
    %c0 = arith.constant 0 : index
    %c0_0 = arith.constant 0 : index
    %0 = vector.load %arg1[%c0, %c0_0] : memref<16x128xf32, #tpu.memory_space<vmem>>, vector<16x128xf32>
    %1 = arith.truncf %0 : vector<16x128xf32> to vector<16x128xbf16>
    %c0_1 = arith.constant 0 : index
    %c0_2 = arith.constant 0 : index
    %2 = vector.load %arg2[%c0_1, %c0_2] : memref<128x128xbf16, #tpu.memory_space<vmem>>, vector<128x128xbf16>
    %cst = arith.constant dense<0.000000e+00> : vector<16x128xf32>
    %3 = tpu.matmul %1, %2, %cst {dimension_numbers = #tpu.dot_dimension_numbers<[1], [0], [0], [1], [0, 0, 1, 1], [], []>} : vector<16x128xbf16>, vector<128x128xbf16>, vector<16x128xf32> -> vector<16x128xf32>
    %c0_3 = arith.constant 0 : index
    %c0_4 = arith.constant 0 : index
    %4 = vector.load %arg3[%c0_3, %c0_4] : memref<1x128xf32, #tpu.memory_space<vmem>>, vector<1x128xf32>
    %5 = vector.broadcast %4 : vector<1x128xf32> to vector<16x128xf32>
    %6 = arith.addf %3, %5 : vector<16x128xf32>
    %cst_5 = arith.constant dense<0.000000e+00> : vector<16xf32>
    %7 = vector.multi_reduction <add>, %6, %cst_5 [1] : vector<16x128xf32> to vector<16xf32>
    %8 = vector.shape_cast %7 : vector<16xf32> to vector<16x1xf32>
    %cst_6 = arith.constant 6.250000e-02 : f32
    %9 = vector.broadcast %cst_6 : f32 to vector<16x1xf32>
    %10 = arith.mulf %8, %9 : vector<16x1xf32>
    %11 = vector.broadcast %10 : vector<16x1xf32> to vector<16x128xf32>
    %12 = arith.subf %6, %11 : vector<16x128xf32>
    %13 = tpu.iota {dimensions = array<i32: 1>} : vector<1x128xi32>
    %c16_i32 = arith.constant 16 : i32
    %14 = vector.broadcast %c16_i32 : i32 to vector<1x128xi32>
    %15 = arith.cmpi slt, %13, %14 : vector<1x128xi32>
    %cst_7 = arith.constant 0.000000e+00 : f32
    %16 = vector.shape_cast %15 : vector<1x128xi1> to vector<1x128xi1>
    %17 = vector.broadcast %16 : vector<1x128xi1> to vector<16x128xi1>
    %18 = vector.broadcast %cst_7 : f32 to vector<16x128xf32>
    %19 = arith.select %17, %12, %18 : vector<16x128xi1>, vector<16x128xf32>
    %20 = arith.mulf %19, %19 : vector<16x128xf32>
    %cst_8 = arith.constant dense<0.000000e+00> : vector<16xf32>
    %21 = vector.multi_reduction <add>, %20, %cst_8 [1] : vector<16x128xf32> to vector<16xf32>
    %22 = vector.shape_cast %21 : vector<16xf32> to vector<16x1xf32>
    %cst_9 = arith.constant 6.250000e-02 : f32
    %23 = vector.broadcast %cst_9 : f32 to vector<16x1xf32>
    %24 = arith.mulf %22, %23 : vector<16x1xf32>
    %cst_10 = arith.constant 9.99999996E-13 : f32
    %25 = vector.broadcast %cst_10 : f32 to vector<16x1xf32>
    %26 = arith.addf %24, %25 : vector<16x1xf32>
    %27 = math.rsqrt %26 : vector<16x1xf32>
    %28 = vector.broadcast %27 : vector<16x1xf32> to vector<16x128xf32>
    %29 = arith.mulf %19, %28 : vector<16x128xf32>
    %c0_11 = arith.constant 0 : index
    %c0_12 = arith.constant 0 : index
    %30 = vector.load %arg4[%c0_11, %c0_12] : memref<1x128xf32, #tpu.memory_space<vmem>>, vector<1x128xf32>
    %31 = vector.broadcast %30 : vector<1x128xf32> to vector<16x128xf32>
    %32 = arith.mulf %29, %31 : vector<16x128xf32>
    %c0_13 = arith.constant 0 : index
    %c0_14 = arith.constant 0 : index
    %33 = vector.load %arg5[%c0_13, %c0_14] : memref<1x128xf32, #tpu.memory_space<vmem>>, vector<1x128xf32>
    %34 = vector.broadcast %33 : vector<1x128xf32> to vector<16x128xf32>
    %35 = arith.addf %32, %34 : vector<16x128xf32>
    %36 = arith.truncf %35 : vector<16x128xf32> to vector<16x128xbf16>
    %c0_15 = arith.constant 0 : index
    %c0_16 = arith.constant 0 : index
    %37 = vector.load %arg6[%c0_15, %c0_16] : memref<128x128xbf16, #tpu.memory_space<vmem>>, vector<128x128xbf16>
    %cst_17 = arith.constant dense<0.000000e+00> : vector<16x128xf32>
    %38 = tpu.matmul %36, %37, %cst_17 {dimension_numbers = #tpu.dot_dimension_numbers<[1], [0], [0], [1], [0, 0, 1, 1], [], []>} : vector<16x128xbf16>, vector<128x128xbf16>, vector<16x128xf32> -> vector<16x128xf32>
    %c0_18 = arith.constant 0 : index
    %c0_19 = arith.constant 0 : index
    %39 = vector.load %arg7[%c0_18, %c0_19] : memref<1x128xf32, #tpu.memory_space<vmem>>, vector<1x128xf32>
    %40 = vector.broadcast %39 : vector<1x128xf32> to vector<16x128xf32>
    %41 = arith.addf %38, %40 : vector<16x128xf32>
    %42 = arith.addf %0, %41 : vector<16x128xf32>
    %c0_20 = arith.constant 0 : index
    %c0_21 = arith.constant 0 : index
    %43 = vector.load %arg8[%c0_20, %c0_21] : memref<16x128xf32, #tpu.memory_space<vmem>>, vector<16x128xf32>
    tpu.vector_store %arg8[%c0_20, %c0_21], %42 {strides = array<i32>} : memref<16x128xf32, #tpu.memory_space<vmem>>, vector<16x128xf32>,
    return
  }
  func.func @transform_0(%arg0: i32) -> (i32, i32) {
    %c0_i32 = arith.constant 0 : i32
    %c0_i32_0 = arith.constant 0 : i32
    return %arg0, %c0_i32 : i32, i32
  }
  func.func @transform_1(%arg0: i32) -> (i32, i32) {
    %c0_i32 = arith.constant 0 : i32
    %c0_i32_0 = arith.constant 0 : i32
    %c0_i32_1 = arith.constant 0 : i32
    return %c0_i32, %c0_i32_0 : i32, i32
  }
  func.func @transform_2(%arg0: i32) -> (i32, i32) {
    %c0_i32 = arith.constant 0 : i32
    %c0_i32_0 = arith.constant 0 : i32
    %c0_i32_1 = arith.constant 0 : i32
    return %c0_i32, %c0_i32_0 : i32, i32
  }
  func.func @transform_3(%arg0: i32) -> (i32, i32) {
    %c0_i32 = arith.constant 0 : i32
    %c0_i32_0 = arith.constant 0 : i32
    %c0_i32_1 = arith.constant 0 : i32
    return %c0_i32, %c0_i32_0 : i32, i32
  }
  func.func @transform_4(%arg0: i32) -> (i32, i32) {
    %c0_i32 = arith.constant 0 : i32
    %c0_i32_0 = arith.constant 0 : i32
    %c0_i32_1 = arith.constant 0 : i32
    return %c0_i32, %c0_i32_0 : i32, i32
  }
  func.func @transform_5(%arg0: i32) -> (i32, i32) {
    %c0_i32 = arith.constant 0 : i32
    %c0_i32_0 = arith.constant 0 : i32
    %c0_i32_1 = arith.constant 0 : i32
    return %c0_i32, %c0_i32_0 : i32, i32
  }
  func.func @transform_6(%arg0: i32) -> (i32, i32) {
    %c0_i32 = arith.constant 0 : i32
    %c0_i32_0 = arith.constant 0 : i32
    %c0_i32_1 = arith.constant 0 : i32
    return %c0_i32, %c0_i32_0 : i32, i32
  }
  func.func @transform_7(%arg0: i32) -> (i32, i32) {
    %c0_i32 = arith.constant 0 : i32
    %c0_i32_0 = arith.constant 0 : i32
    return %arg0, %c0_i32 : i32, i32
  }
}

</mosaic_0001>

<llo_original>
// kernel: tpu_custom_call.1
$region0: #{tpu_custom_call.1}
  #allocation0 [shape = 'u32[]', space=smem, size = 0x4, offset = 0x4, fixed_abs, tag = 'smem constant byte address 0x4 - core index']
  #allocation1 [shape = 'u32[144,128]{1,0:T(1,128)}', space=vmem, size = 0x12000, scoped, tag = 'internal scratch']
  %s0 = inlined_call_operand.hbm [shape: f32[16,128], index: 0, kind: input, shape index: {}, may-alias: {0,7}]
  %s1 = inlined_call_operand.hbm [shape: bf16[128,128], index: 1, kind: input, shape index: {}]
  %s2 = inlined_call_operand.vmem [shape: f32[1,128], index: 2, kind: input, shape index: {}]
  %s3 = inlined_call_operand.vmem [shape: f32[1,128], index: 3, kind: input, shape index: {}]
  %s4 = inlined_call_operand.vmem [shape: f32[1,128], index: 4, kind: input, shape index: {}]
  %s5 = inlined_call_operand.hbm [shape: bf16[128,128], index: 5, kind: input, shape index: {}]
  %s6 = inlined_call_operand.vmem [shape: f32[1,128], index: 6, kind: input, shape index: {}]
  %s7 = inlined_call_operand.hbm [shape: f32[16,128], index: 7, kind: output, shape index: {}, may-alias: {0,7}]
  %s8 = sld [smem:[#allocation0]]
  $region50: #{tpu_custom_call.1} parent=0
    _
  %s10 = ssub.s32 1, %s8
  %s11 = scalar_select 0, %s10, %s8
  $region1: #{tpu_custom_call.1} parent=0
    #allocation2 [shape = 'u8[8192]{0}', space=vmem, size = 0x2000, scoped, tag = 'input window, operand 0, single buffered']
    #allocation3 [shape = 's32[1]{0}', space=sflag, size = 0x4, scoped, tag = 'scoped memory for tpu_custom_call.1']
    #allocation4 [shape = 's32[1]{0}', space=sflag, size = 0x4, scoped, tag = 'scoped memory for tpu_custom_call.1']
    #allocation5 [shape = 'u8[32768]{0}', space=vmem, size = 0x8000, scoped, tag = 'input window, operand 1, single buffered']
    #allocation6 [shape = 's32[1]{0}', space=sflag, size = 0x4, scoped, tag = 'scoped memory for tpu_custom_call.1']
    #allocation7 [shape = 'u8[32768]{0}', space=vmem, size = 0x8000, scoped, tag = 'input window, operand 5, single buffered']
    #allocation8 [shape = 'u8[8192]{0}', space=vmem, size = 0x2000, scoped, tag = 'output window, operand 0, single buffered']
    %12 = vsyncpa [#allocation3], 0
    %13 = vsyncpa [#allocation6], 0
    %14 = vsyncpa [#allocation4], 0
    // Predicated region
    $region2: #{tpu_custom_call.1} parent=1 // pred_check
      _
    $region3: #{tpu_custom_call.1} parent=1 // pred_check_branch
      %16 = sbr.rel (0) target = $region5
    $region4: #{tpu_custom_call.1} parent=1 // pred_region
      %s18 = ssub.s32 256, 256
      %19 = vsyncadd [#allocation3], %s18
      %s20 = sshll.u32 [#allocation2], 4
      %s21 = int_to_ptr.vmem [resolvable:$true] %s20
      %26 = dma.hbm_to_vmem [thread:$0]  %s0, 256, %s21, [#allocation3], 128, 128, 8
    $region5: #{tpu_custom_call.1} parent=1 // pred_fallthru
      _
    // Predicated region
    $region6: #{tpu_custom_call.1} parent=1 // pred_check
      _
    $region7: #{tpu_custom_call.1} parent=1 // pred_check_branch
      %28 = sbr.rel (0) target = $region9
    $region8: #{tpu_custom_call.1} parent=1 // pred_region
      %s30 = ssub.s32 1024, 1024
      %31 = vsyncadd [#allocation6], %s30
      %s32 = sshll.u32 [#allocation5], 4
      %s33 = int_to_ptr.vmem [resolvable:$true] %s32
      %38 = dma.hbm_to_vmem [thread:$0]  %s1, 1024, %s33, [#allocation6], 64, 64, 4
    $region9: #{tpu_custom_call.1} parent=1 // pred_fallthru
      _
    // Predicated region
    $region10: #{tpu_custom_call.1} parent=1 // pred_check
      _
    $region11: #{tpu_custom_call.1} parent=1 // pred_check_branch
      %40 = sbr.rel (0) target = $region13
    $region12: #{tpu_custom_call.1} parent=1 // pred_region
      _
    $region13: #{tpu_custom_call.1} parent=1 // pred_fallthru
      _
    // Predicated region
    $region14: #{tpu_custom_call.1} parent=1 // pred_check
      _
    $region15: #{tpu_custom_call.1} parent=1 // pred_check_branch
      %42 = sbr.rel (0) target = $region17
    $region16: #{tpu_custom_call.1} parent=1 // pred_region
      _
    $region17: #{tpu_custom_call.1} parent=1 // pred_fallthru
      _
    // Predicated region
    $region18: #{tpu_custom_call.1} parent=1 // pred_check
      _
    $region19: #{tpu_custom_call.1} parent=1 // pred_check_branch
      %44 = sbr.rel (0) target = $region21
    $region20: #{tpu_custom_call.1} parent=1 // pred_region
      _
    $region21: #{tpu_custom_call.1} parent=1 // pred_fallthru
      _
    // Predicated region
    $region22: #{tpu_custom_call.1} parent=1 // pred_check
      _
    $region23: #{tpu_custom_call.1} parent=1 // pred_check_branch
      %46 = sbr.rel (0) target = $region25
    $region24: #{tpu_custom_call.1} parent=1 // pred_region
      %s48 = ssub.s32 1024, 1024
      %49 = vsyncadd [#allocation6], %s48
      %s50 = sshll.u32 [#allocation7], 4
      %s51 = int_to_ptr.vmem [resolvable:$true] %s50
      %56 = dma.hbm_to_vmem [thread:$0]  %s5, 1024, %s51, [#allocation6], 64, 64, 4
    $region25: #{tpu_custom_call.1} parent=1 // pred_fallthru
      _
    // Predicated region
    $region26: #{tpu_custom_call.1} parent=1 // pred_check
      _
    $region27: #{tpu_custom_call.1} parent=1 // pred_check_branch
      %58 = sbr.rel (0) target = $region29
    $region28: #{tpu_custom_call.1} parent=1 // pred_region
      _
    $region29: #{tpu_custom_call.1} parent=1 // pred_fallthru
      _
    // Predicated region
    $region30: #{tpu_custom_call.1} parent=1 // pred_check
      _
    $region31: #{tpu_custom_call.1} parent=1 // pred_check_branch
      %60 = sbr.rel (0) target = $region33
    $region32: #{tpu_custom_call.1} parent=1 // pred_region
      %61 = dma.done [#allocation3], 256
    $region33: #{tpu_custom_call.1} parent=1 // pred_fallthru
      _
    // Predicated region
    $region34: #{tpu_custom_call.1} parent=1 // pred_check
      _
    $region35: #{tpu_custom_call.1} parent=1 // pred_check_branch
      %63 = sbr.rel (0) target = $region37
    $region36: #{tpu_custom_call.1} parent=1 // pred_region
      %64 = dma.done [#allocation6], 1024
    $region37: #{tpu_custom_call.1} parent=1 // pred_fallthru
      _
    // Predicated region
    $region38: #{tpu_custom_call.1} parent=1 // pred_check
      _
    $region39: #{tpu_custom_call.1} parent=1 // pred_check_branch
      %66 = sbr.rel (0) target = $region41
    $region40: #{tpu_custom_call.1} parent=1 // pred_region
      %67 = dma.done [#allocation6], 1024
    $region41: #{tpu_custom_call.1} parent=1 // pred_fallthru
      _
    %v69 = vld [vmem:[#allocation2] sm:$0xff]
    %v70 = vld [vmem:[#allocation2 + $0x8] sm:$0xff]
    %v71 = vpack.c.bf16 %v70, %v69
    %v72 = vld [vmem:[#allocation5] sm:$0xf]
    %v73 = vld [vmem:[#allocation5 + $0x4] sm:$0xf]
    %v74 = vld [vmem:[#allocation5 + $0x8] sm:$0xf]
    %v75 = vld [vmem:[#allocation5 + $0xc] sm:$0xf]
    %v76 = vld [vmem:[#allocation5 + $0x10] sm:$0xf]
    %v77 = vld [vmem:[#allocation5 + $0x14] sm:$0xf]
    %v78 = vld [vmem:[#allocation5 + $0x18] sm:$0xf]
    %v79 = vld [vmem:[#allocation5 + $0x1c] sm:$0xf]
    %v80 = vld [vmem:[#allocation5 + $0x20] sm:$0xf]
    %v81 = vld [vmem:[#allocation5 + $0x24] sm:$0xf]
    %v82 = vld [vmem:[#allocation5 + $0x28] sm:$0xf]
    %v83 = vld [vmem:[#allocation5 + $0x2c] sm:$0xf]
    %v84 = vld [vmem:[#allocation5 + $0x30] sm:$0xf]
    %v85 = vld [vmem:[#allocation5 + $0x34] sm:$0xf]
    %v86 = vld [vmem:[#allocation5 + $0x38] sm:$0xf]
    %v87 = vld [vmem:[#allocation5 + $0x3c] sm:$0xf]
    %v88 = vld [vmem:[%s2] sm:$0x1]
    %v90 = vlaneseq
    %v91 = vshrl.u32 %v90, 7
    %v92 = vsub.s32 0, %v91
    %v93 = vrot.slane %v88, %v92
    %v111 = vunpack.c.l.b16 %v72
    %v112 = vunpack.c.l.b16 %v73
    %v113 = vunpack.c.l.b16 %v74
    %v114 = vunpack.c.l.b16 %v75
    %v115 = vunpack.c.l.b16 %v76
    %v116 = vunpack.c.l.b16 %v77
    %v117 = vunpack.c.l.b16 %v78
    %v118 = vunpack.c.l.b16 %v79
    %v119 = vunpack.c.l.b16 %v80
    %v120 = vunpack.c.l.b16 %v81
    %v121 = vunpack.c.l.b16 %v82
    %v122 = vunpack.c.l.b16 %v83
    %v123 = vunpack.c.l.b16 %v84
    %v124 = vunpack.c.l.b16 %v85
    %v125 = vunpack.c.l.b16 %v86
    %v126 = vunpack.c.l.b16 %v87
    %v127 = vpack.c.b16 %v112, %v111
    %v128 = vpack.c.b16 %v114, %v113
    %v129 = vpack.c.b16 %v116, %v115
    %v130 = vpack.c.b16 %v118, %v117
    %v131 = vpack.c.b16 %v120, %v119
    %v132 = vpack.c.b16 %v122, %v121
    %v133 = vpack.c.b16 %v124, %v123
    %v134 = vpack.c.b16 %v126, %v125
    %143 = vmatprep.subr.bf16.mxu0 0
    %144 = vmatpush1.bf16.msra.mxu0 %v134
    %145 = vmatprep.subr.bf16.mxu0 0
    %146 = vmatpush1.bf16.msra.mxu0 %v133
    %147 = vmatprep.subr.bf16.mxu0 0
    %148 = vmatpush1.bf16.msra.mxu0 %v132
    %149 = vmatprep.subr.bf16.mxu0 0
    %150 = vmatpush1.bf16.msra.mxu0 %v131
    %151 = vmatprep.subr.bf16.mxu0 0
    %152 = vmatpush1.bf16.msra.mxu0 %v130
    %153 = vmatprep.subr.bf16.mxu0 0
    %154 = vmatpush1.bf16.msra.mxu0 %v129
    %155 = vmatprep.subr.bf16.mxu0 0
    %156 = vmatpush1.bf16.msra.mxu0 %v128
    %157 = vmatprep.subr.bf16.mxu0 0
    %158 = vmatpush1.bf16.msra.mxu0 %v127
    %159 = vmatprep.subr.bf16.mxu0 0
    %160 = vmatpush2.bf16.msra.mxu0 0
    %161 = vmatprep.subr.bf16.mxu0 0
    %162 = vmatpush2.bf16.msra.mxu0 0
    %163 = vmatprep.subr.bf16.mxu0 0
    %164 = vmatpush2.bf16.msra.mxu0 0
    %165 = vmatprep.subr.bf16.mxu0 0
    %166 = vmatpush2.bf16.msra.mxu0 0
    %167 = vmatprep.subr.bf16.mxu0 0
    %168 = vmatpush2.bf16.msra.mxu0 0
    %169 = vmatprep.subr.bf16.mxu0 0
    %170 = vmatpush2.bf16.msra.mxu0 0
    %171 = vmatprep.subr.bf16.mxu0 0
    %172 = vmatpush2.bf16.msra.mxu0 0
    %173 = vmatprep.subr.bf16.mxu0 0
    %174 = vmatpush2.bf16.msra.mxu0 0
    %175 = vmatprep.mubr.bf16.mxu0 0
    %176 = vmatmul.mubr.bf16.gmra.mxu0 %v71
    %v177 = vpop.f32.mrf.mxu0
    %v178 = vadd.f32 %v93, %v177
    %v179 = vpop.f32.mrf.mxu0
    %v180 = vpop.f32.mrf.mxu0
    %v181 = vadd.f32 %v93, %v180
    %v182 = vpop.f32.mrf.mxu0
    %183 = vdwg.mxu0
    %184 = vadd.xlane.f32.xlu0 %v178
    %v185 = vpop.xlane.xlu0 %184
    %186 = vadd.xlane.f32.xlu0 %v181
    %v187 = vpop.xlane.xlu0 %186
    %v188 = vmul.f32 %v185, 0.0625
    %v189 = vmul.f32 %v187, 0.0625
    %v190 = vsub.f32 %v178, %v188
    %v191 = vsub.f32 %v181, %v189
    %v192 = vlaneseq
    %v193 = vand.u32 %v192, 127
    %vm194 = vcmp.lt.s32.totalorder %v193, 16
    %v195 = vsel %vm194, 1, 0
    %vm196 = vcmp.eq.s32.totalorder %v195, 1
    %v197 = vsel %vm196, %v190, 0.0
    %v198 = vsel %vm196, %v191, 0.0
    %v199 = vmul.f32 %v197, %v197
    %v200 = vmul.f32 %v198, %v198
    %201 = vadd.xlane.f32.xlu0 %v199
    %v202 = vpop.xlane.xlu0 %201
    %203 = vadd.xlane.f32.xlu0 %v200
    %v204 = vpop.xlane.xlu0 %203
    %v205 = vmul.f32 %v202, 0.0625
    %v206 = vmul.f32 %v204, 0.0625
    %v207 = vadd.f32 %v205, 1e-12
    %v208 = vadd.f32 %v206, 1e-12
    %v209 = vrsqrt.pop %v207
    %v210 = vrsqrt.pop %v208
    %v211 = vmul.f32 %v197, %v209
    %v212 = vmul.f32 %v198, %v210
    %v213 = vld [vmem:[%s3] sm:$0x1]
    %v215 = vlaneseq
    %v216 = vshrl.u32 %v215, 7
    %v217 = vsub.s32 0, %v216
    %v218 = vrot.slane %v213, %v217
    %v220 = vmul.f32 %v211, %v218
    %v221 = vmul.f32 %v212, %v218
    %v222 = vld [vmem:[%s4] sm:$0x1]
    %v224 = vlaneseq
    %v225 = vshrl.u32 %v224, 7
    %v226 = vsub.s32 0, %v225
    %v227 = vrot.slane %v222, %v226
    %v229 = vadd.f32 %v220, %v227
    %v230 = vadd.f32 %v221, %v227
    %v231 = vpack.c.bf16 %v230, %v229
    %v232 = vld [vmem:[#allocation7] sm:$0xf]
    %v233 = vld [vmem:[#allocation7 + $0x4] sm:$0xf]
    %v234 = vld [vmem:[#allocation7 + $0x8] sm:$0xf]
    %v235 = vld [vmem:[#allocation7 + $0xc] sm:$0xf]
    %v236 = vld [vmem:[#allocation7 + $0x10] sm:$0xf]
    %v237 = vld [vmem:[#allocation7 + $0x14] sm:$0xf]
    %v238 = vld [vmem:[#allocation7 + $0x18] sm:$0xf]
    %v239 = vld [vmem:[#allocation7 + $0x1c] sm:$0xf]
    %v240 = vld [vmem:[#allocation7 + $0x20] sm:$0xf]
    %v241 = vld [vmem:[#allocation7 + $0x24] sm:$0xf]
    %v242 = vld [vmem:[#allocation7 + $0x28] sm:$0xf]
    %v243 = vld [vmem:[#allocation7 + $0x2c] sm:$0xf]
    %v244 = vld [vmem:[#allocation7 + $0x30] sm:$0xf]
    %v245 = vld [vmem:[#allocation7 + $0x34] sm:$0xf]
    %v246 = vld [vmem:[#allocation7 + $0x38] sm:$0xf]
    %v247 = vld [vmem:[#allocation7 + $0x3c] sm:$0xf]
    %v248 = vld [vmem:[%s6] sm:$0x1]
    %v250 = vlaneseq
    %v251 = vshrl.u32 %v250, 7
    %v252 = vsub.s32 0, %v251
    %v253 = vrot.slane %v248, %v252
    %v271 = vunpack.c.l.b16 %v232
    %v272 = vunpack.c.l.b16 %v233
    %v273 = vunpack.c.l.b16 %v234
    %v274 = vunpack.c.l.b16 %v235
    %v275 = vunpack.c.l.b16 %v236
    %v276 = vunpack.c.l.b16 %v237
    %v277 = vunpack.c.l.b16 %v238
    %v278 = vunpack.c.l.b16 %v239
    %v279 = vunpack.c.l.b16 %v240
    %v280 = vunpack.c.l.b16 %v241
    %v281 = vunpack.c.l.b16 %v242
    %v282 = vunpack.c.l.b16 %v243
    %v283 = vunpack.c.l.b16 %v244
    %v284 = vunpack.c.l.b16 %v245
    %v285 = vunpack.c.l.b16 %v246
    %v286 = vunpack.c.l.b16 %v247
    %v287 = vpack.c.b16 %v272, %v271
    %v288 = vpack.c.b16 %v274, %v273
    %v289 = vpack.c.b16 %v276, %v275
    %v290 = vpack.c.b16 %v278, %v277
    %v291 = vpack.c.b16 %v280, %v279
    %v292 = vpack.c.b16 %v282, %v281
    %v293 = vpack.c.b16 %v284, %v283
    %v294 = vpack.c.b16 %v286, %v285
    %303 = vmatprep.subr.bf16.mxu0 0
    %304 = vmatpush1.bf16.msra.mxu0 %v294
    %305 = vmatprep.subr.bf16.mxu0 0
    %306 = vmatpush1.bf16.msra.mxu0 %v293
    %307 = vmatprep.subr.bf16.mxu0 0
    %308 = vmatpush1.bf16.msra.mxu0 %v292
    %309 = vmatprep.subr.bf16.mxu0 0
    %310 = vmatpush1.bf16.msra.mxu0 %v291
    %311 = vmatprep.subr.bf16.mxu0 0
    %312 = vmatpush1.bf16.msra.mxu0 %v290
    %313 = vmatprep.subr.bf16.mxu0 0
    %314 = vmatpush1.bf16.msra.mxu0 %v289
    %315 = vmatprep.subr.bf16.mxu0 0
    %316 = vmatpush1.bf16.msra.mxu0 %v288
    %317 = vmatprep.subr.bf16.mxu0 0
    %318 = vmatpush1.bf16.msra.mxu0 %v287
    %319 = vmatprep.subr.bf16.mxu0 0
    %320 = vmatpush2.bf16.msra.mxu0 0
    %321 = vmatprep.subr.bf16.mxu0 0
    %322 = vmatpush2.bf16.msra.mxu0 0
    %323 = vmatprep.subr.bf16.mxu0 0
    %324 = vmatpush2.bf16.msra.mxu0 0
    %325 = vmatprep.subr.bf16.mxu0 0
    %326 = vmatpush2.bf16.msra.mxu0 0
    %327 = vmatprep.subr.bf16.mxu0 0
    %328 = vmatpush2.bf16.msra.mxu0 0
    %329 = vmatprep.subr.bf16.mxu0 0
    %330 = vmatpush2.bf16.msra.mxu0 0
    %331 = vmatprep.subr.bf16.mxu0 0
    %332 = vmatpush2.bf16.msra.mxu0 0
    %333 = vmatprep.subr.bf16.mxu0 0
    %334 = vmatpush2.bf16.msra.mxu0 0
    %335 = vmatprep.mubr.bf16.mxu0 0
    %336 = vmatmul.mubr.bf16.gmra.mxu0 %v231
    %v337 = vpop.f32.mrf.mxu0
    %v338 = vadd.f32 %v253, %v337
    %v339 = vpop.f32.mrf.mxu0
    %v340 = vpop.f32.mrf.mxu0
    %v341 = vadd.f32 %v253, %v340
    %v342 = vpop.f32.mrf.mxu0
    %343 = vdwg.mxu0
    %v344 = vadd.f32 %v69, %v338
    %v345 = vadd.f32 %v70, %v341
    %346 = vst [vmem:[#allocation8] sm:$0xff] %v344
    %347 = vst [vmem:[#allocation8 + $0x8] sm:$0xff] %v345
    // Predicated region
    $region42: #{tpu_custom_call.1} parent=1 // pred_check
      _
    $region43: #{tpu_custom_call.1} parent=1 // pred_check_branch
      %349 = sbr.rel (0) target = $region45
    $region44: #{tpu_custom_call.1} parent=1 // pred_region
      %s351 = ssub.s32 256, 256
      %352 = vsyncadd [#allocation4], %s351
      %s353 = sshll.u32 [#allocation8], 4
      %s354 = int_to_ptr.vmem [resolvable:$true] %s353
      %359 = dma.vmem_to_hbm [thread:$0]  %s354, 256, %s7, [#allocation4], 128, 128, 8
    $region45: #{tpu_custom_call.1} parent=1 // pred_fallthru
      _
    // Predicated region
    $region46: #{tpu_custom_call.1} parent=1 // pred_check
      _
    $region47: #{tpu_custom_call.1} parent=1 // pred_check_branch
      %361 = sbr.rel (0) target = $region49
    $region48: #{tpu_custom_call.1} parent=1 // pred_region
      %362 = dma.done [#allocation4], 256
    $region49: #{tpu_custom_call.1} parent=1 // pred_fallthru
      _
    %363 = vsyncpa [#allocation3], 1
    %364 = vsyncpa [#allocation6], 1
    %365 = vsyncpa [#allocation4], 1

</llo_original>
